<compile_context>
chip_gen: v7x
topology: tpu7x:2x2x1
jax: 0.10.0
libtpu: 0.0.40
codegen_flags: <defaults>
</compile_context>

<pallas_src>
import jax
import jax.numpy as jnp
from jax.experimental import pallas as pl
from jax.experimental.pallas import tpu as pltpu


def _stack_kernel_flat(re_ref, im_ref, o_ref):
    # re_ref / im_ref: (TN, HW); o_ref: (TN, 2*HW).  HW % 128 == 0, so both
    # stores are lane-aligned, unmasked, full-width writes.
    hw = re_ref.shape[-1]
    o_ref[:, :hw] = re_ref[...]
    o_ref[:, hw:] = im_ref[...]


def _stack_kernel_4d(re_ref, im_ref, o_ref):
    # Fallback tiling: re_ref / im_ref: (TN, H, W); o_ref: (TN, 2, H, W).
    o_ref[:, 0, :, :] = re_ref[...]
    o_ref[:, 1, :, :] = im_ref[...]


def _choose_tn(n: int, hw: int) -> int:
    """Rows of (B*C*D) processed per grid step.

    Per grid step VMEM (re tile + im tile + stacked out tile, double buffered):
        2 * (TN*HW + TN*HW + 2*TN*HW) * 4 B = 32 * TN * HW bytes.
    Keep that ~16 MiB (well inside v7x's 64 MiB physical VMEM and a 32 MiB
    scoped limit), keep >= 2 grid steps (v7x has 2 TensorCores), and keep TN a
    multiple of 8 (sublane tiling) or equal to the full extent.
    """
    vmem_budget = 16 * 1024 * 1024
    tn = max(1, vmem_budget // (32 * hw))
    tn = min(tn, -(-n // 2))          # at least 2 grid steps when possible
    if n <= 8:
        return n                      # full extent: always a legal block dim
    return max(8, (tn // 8) * 8)


def complex_to_real_batch(x: jax.Array) -> jax.Array:
    """x: complex array, ndim == 5 -> real array with size-2 axis at dim 3."""
    assert x.ndim == 5, "expected a 5-D complex input"
    if not jnp.issubdtype(x.dtype, jnp.complexfloating):
        raise TypeError(f"expected a complex input, got {x.dtype}")
    if x.dtype == jnp.complex128:
        # Pallas TPU has no float64 support; compute in complex64 precision.
        x = x.astype(jnp.complex64)

    B, C, D, H, W = x.shape
    N, HW = B * C * D, H * W

    # Glue: complex -> (real, imag).  allow_input_fusion below lets XLA fold
    # this extraction into the kernel's input DMA instead of an extra HBM pass.
    re = jnp.real(x)
    im = jnp.imag(x)
    out_dtype = re.dtype  # float32

    tn = _choose_tn(N, HW)
    grid = (pl.cdiv(N, tn),)
    cost = pl.CostEstimate(
        flops=0, transcendentals=0, bytes_accessed=4 * N * HW * 4
    )
    cparams = pltpu.CompilerParams(
        dimension_semantics=("parallel",),
        vmem_limit_bytes=32 * 1024 * 1024,
        allow_input_fusion=[True, True],
    )

    if HW % 128 == 0:
        # Lane-dense path: (N, HW) -> (N, 2*HW); same memory layout as the
        # final (B, C, D, 2, H, W) result, so the trailing reshape is free.
        out_flat = pl.pallas_call(
            _stack_kernel_flat,
            out_shape=jax.ShapeDtypeStruct((N, 2 * HW), out_dtype),
            grid_spec=pltpu.PrefetchScalarGridSpec(
                num_scalar_prefetch=0,
                grid=grid,
                in_specs=[
                    pl.BlockSpec((tn, HW), lambda i: (i, 0)),
                    pl.BlockSpec((tn, HW), lambda i: (i, 0)),
                ],
                out_specs=pl.BlockSpec((tn, 2 * HW), lambda i: (i, 0)),
            ),
            compiler_params=cparams,
            cost_estimate=cost,
        )(re.reshape(N, HW), im.reshape(N, HW))
    else:
        # Fallback for H*W not a multiple of 128: keep (H, W) as full-extent
        # trailing block dims, still block over N.
        out_flat = pl.pallas_call(
            _stack_kernel_4d,
            out_shape=jax.ShapeDtypeStruct((N, 2, H, W), out_dtype),
            grid_spec=pltpu.PrefetchScalarGridSpec(
                num_scalar_prefetch=0,
                grid=grid,
                in_specs=[
                    pl.BlockSpec((tn, H, W), lambda i: (i, 0, 0)),
                    pl.BlockSpec((tn, H, W), lambda i: (i, 0, 0)),
                ],
                out_specs=pl.BlockSpec((tn, 2, H, W), lambda i: (i, 0, 0, 0)),
            ),
            compiler_params=cparams,
            cost_estimate=cost,
        )(re.reshape(N, H, W), im.reshape(N, H, W))

    return out_flat.reshape(B, C, D, 2, H, W)


if __name__ == "__main__":
    key = jax.random.PRNGKey(0)
    k_re, k_im = jax.random.split(key)

    fn = jax.jit(complex_to_real_batch)

    # Lane-dense path (H*W = 256, a multiple of 128).
    B, C, D, H, W = 2, 4, 3, 16, 16
    x_re = jax.random.normal(k_re, (B, C, D, H, W), dtype=jnp.float32)
    x_im = jax.random.normal(k_im, (B, C, D, H, W), dtype=jnp.float32)
    x = jax.lax.complex(x_re, x_im)  # complex64, shape (B, C, D, H, W)

    out = jax.block_until_ready(fn(x))
    ref = jnp.stack((jnp.real(x), jnp.imag(x)), axis=3)
    assert out.shape == (B, C, D, 2, H, W), out.shape
    assert out.dtype == jnp.float32, out.dtype
    assert jnp.array_equal(out, ref), "lane-dense path mismatch vs reference"

    # Fallback path (H*W = 30, not a multiple of 128).
    B2, C2, D2, H2, W2 = 2, 3, 2, 5, 6
    y_re = jax.random.normal(k_re, (B2, C2, D2, H2, W2), dtype=jnp.float32)
    y_im = jax.random.normal(k_im, (B2, C2, D2, H2, W2), dtype=jnp.float32)
    y = jax.lax.complex(y_re, y_im)

    out2 = jax.block_until_ready(fn(y))
    ref2 = jnp.stack((jnp.real(y), jnp.imag(y)), axis=3)
    assert out2.shape == (B2, C2, D2, 2, H2, W2), out2.shape
    assert jnp.array_equal(out2, ref2), "fallback path mismatch vs reference"

    print("KERNEL_OK")
</pallas_src>

<mosaic_0001>
module attributes {stable_mosaic.version = 11 : i64} {
  func.func @_stack_kernel_flat(%arg0: i32, %arg1: memref<8x256xf32, #tpu.memory_space<vmem>>, %arg2: memref<8x256xf32, #tpu.memory_space<vmem>>, %arg3: memref<8x512xf32, #tpu.memory_space<vmem>>) attributes {dimension_semantics = [#tpu.dimension_semantics<parallel>], iteration_bounds = array<i64: 3>, scalar_prefetch = 0 : i64, scratch_operands = 0 : i64, tpu.core_type = #tpu.core_type<tc>, window_params = [{transform_indices = @transform_0, window_bounds = array<i64: 8, 256>}, {transform_indices = @transform_1, window_bounds = array<i64: 8, 256>}, {transform_indices = @transform_2, window_bounds = array<i64: 8, 512>}]} {
    %c0 = arith.constant 0 : index
    %c0_0 = arith.constant 0 : index
    %0 = vector.load %arg1[%c0, %c0_0] : memref<8x256xf32, #tpu.memory_space<vmem>>, vector<8x256xf32>
    %c0_1 = arith.constant 0 : index
    %c0_2 = arith.constant 0 : index
    %1 = vector.load %arg3[%c0_1, %c0_2] : memref<8x512xf32, #tpu.memory_space<vmem>>, vector<8x256xf32>
    tpu.vector_store %arg3[%c0_1, %c0_2], %0 {strides = array<i32>} : memref<8x512xf32, #tpu.memory_space<vmem>>, vector<8x256xf32>,
    %c0_3 = arith.constant 0 : index
    %c0_4 = arith.constant 0 : index
    %2 = vector.load %arg2[%c0_3, %c0_4] : memref<8x256xf32, #tpu.memory_space<vmem>>, vector<8x256xf32>
    %c0_5 = arith.constant 0 : index
    %c256 = arith.constant 256 : index
    %3 = vector.load %arg3[%c0_5, %c256] : memref<8x512xf32, #tpu.memory_space<vmem>>, vector<8x256xf32>
    tpu.vector_store %arg3[%c0_5, %c256], %2 {strides = array<i32>} : memref<8x512xf32, #tpu.memory_space<vmem>>, vector<8x256xf32>,
    return
  }
  func.func @transform_0(%arg0: i32) -> (i32, i32) {
    %c0_i32 = arith.constant 0 : i32
    %c0_i32_0 = arith.constant 0 : i32
    return %arg0, %c0_i32 : i32, i32
  }
  func.func @transform_1(%arg0: i32) -> (i32, i32) {
    %c0_i32 = arith.constant 0 : i32
    %c0_i32_0 = arith.constant 0 : i32
    return %arg0, %c0_i32 : i32, i32
  }
  func.func @transform_2(%arg0: i32) -> (i32, i32) {
    %c0_i32 = arith.constant 0 : i32
    %c0_i32_0 = arith.constant 0 : i32
    return %arg0, %c0_i32 : i32, i32
  }
}

</mosaic_0001>

<llo_original>
// kernel: custom-call.1
$region0: #{custom-call.1}
  %s0 = inlined_call_operand.hbm [shape: c64[2,4,3,16,16], index: 0, kind: input, shape index: {}]
  %s1 = inlined_call_operand.vmem [shape: f32[2,4,3,16,16], index: 1, kind: output, shape index: {}]
  %s2 = scalar_lea.hbm %s0, 6144
  $region1: #{custom-call.1} parent=0
    #allocation0 [shape = 's32[1]{0}', space=sflag, size = 0x4, scoped, tag = 'scoped memory for custom-call.1']
    %3 = vsyncpa [#allocation0], 0
    %s4 = sshll.u32 %s1, 4
    %s5 = int_to_ptr.vmem [resolvable:$true] %s4
    %7 = dma.hbm_to_vmem [thread:$0]  %s2, 6144, %s5, [#allocation0]
    %8 = dma.done [#allocation0], 6144
    %9 = vsyncpa [#allocation0], 1

// kernel: custom-call
$region0: #{custom-call}
  %s0 = inlined_call_operand.hbm [shape: c64[2,4,3,16,16], index: 0, kind: input, shape index: {}]
  %s1 = inlined_call_operand.vmem [shape: f32[2,4,3,16,16], index: 1, kind: output, shape index: {}]
  $region1: #{custom-call} parent=0
    #allocation0 [shape = 's32[1]{0}', space=sflag, size = 0x4, scoped, tag = 'scoped memory for custom-call']
    %2 = vsyncpa [#allocation0], 0
    %s3 = sshll.u32 %s1, 4
    %s4 = int_to_ptr.vmem [resolvable:$true] %s3
    %6 = dma.hbm_to_vmem [thread:$0]  %s0, 6144, %s4, [#allocation0]
    %7 = dma.done [#allocation0], 6144
    %8 = vsyncpa [#allocation0], 1

// kernel: complex_to_real_batch.1
$region0: #{complex_to_real_batch.1}
  #allocation0 [shape = 'u32[]', space=smem, size = 0x4, offset = 0x4, fixed_abs, tag = 'smem constant byte address 0x4 - core index']
  #allocation1 [shape = 'u32[144,128]{1,0:T(1,128)}', space=vmem, size = 0x12000, scoped, tag = 'internal scratch']
  %s0 = inlined_call_operand.vmem [shape: f32[24,256], index: 0, kind: input, shape index: {}]
  %s1 = inlined_call_operand.vmem [shape: f32[24,256], index: 1, kind: input, shape index: {}]
  %s2 = inlined_call_operand.vmem [shape: f32[24,512], index: 2, kind: output, shape index: {}]
  %s3 = sld [smem:[#allocation0]]
  $region41: #{complex_to_real_batch.1} parent=0
    _
  %s5 = ssub.s32 1, %s3
  %s6 = scalar_select 0, %s5, %s3
  loop: start=0, step=1, limit=5
  $region2: #{complex_to_real_batch.1} parent=0 // loop_pre_header
    _
  $region3: #{complex_to_real_batch.1} parent=0 // loop_header
    %s8 = sphi 0, %s12
    %p9 = scmp.ge.s32.totalorder %s8, 5
    %s18 = sphi 0, %s20
    %s21 = sphi 0, %s18
    %s22 = sphi 0, %s21
    %s38 = sphi 0, %s22
    %s44 = sphi 0, %s46
    %s47 = sphi 0, %s44
    %s48 = sphi 0, %s47
    %s64 = sphi 0, %s48
    %s70 = sphi 0, %s72
    %s73 = sphi 0, %s70
    %s74 = sphi 0, %s73
    %s90 = sphi 0, %s74
  $region4: #{complex_to_real_batch.1} parent=0 // loop_header_branch
    %11 = sbr.rel (%p9) target = $region8
  $region5: #{complex_to_real_batch.1} parent=0 // loop_body
    %s13 = ssub.s32 %s8, 1
    %s14 = ssub.s32 %s8, 2
    %s15 = sadd.s32 %s8, 1
    %s16 = ssub.s32 %s8, %s15
    %p17 = scmp.eq.s32.totalorder %s16, 0
    %s19 = sadd.s32 %s18, 1
    %s20 = scalar_select %p17, %s18, %s19
    %p23 = pneg %p17
    %p24 = scmp.eq.s32.totalorder %s8, 2
    %p25 = por %p23, %p24
    %p26 = scmp.ne.s32.totalorder %s18, %s21
    %p27 = scmp.eq.s32.totalorder %s8, 0
    %p28 = por %p26, %p27
    %p29 = scmp.ne.s32.totalorder %s18, %s21
    %p30 = scmp.eq.s32.totalorder %s13, 2
    %p31 = por %p29, %p30
    %p32 = scmp.ne.s32.totalorder %s21, %s22
    %p33 = scmp.eq.s32.totalorder %s13, 0
    %p34 = por %p32, %p33
    %p35 = scmp.ne.s32.totalorder %s21, %s22
    %p36 = scmp.eq.s32.totalorder %s14, 2
    %p37 = por %p35, %p36
    %p39 = scmp.ne.s32.totalorder %s22, %s38
    %p40 = scmp.eq.s32.totalorder %s14, 0
    %p41 = por %p39, %p40
    %s42 = ssub.s32 %s8, %s15
    %p43 = scmp.eq.s32.totalorder %s42, 0
    %s45 = sadd.s32 %s44, 1
    %s46 = scalar_select %p43, %s44, %s45
    %p49 = pneg %p43
    %p50 = scmp.eq.s32.totalorder %s8, 2
    %p51 = por %p49, %p50
    %p52 = scmp.ne.s32.totalorder %s44, %s47
    %p53 = scmp.eq.s32.totalorder %s8, 0
    %p54 = por %p52, %p53
    %p55 = scmp.ne.s32.totalorder %s44, %s47
    %p56 = scmp.eq.s32.totalorder %s13, 2
    %p57 = por %p55, %p56
    %p58 = scmp.ne.s32.totalorder %s47, %s48
    %p59 = scmp.eq.s32.totalorder %s13, 0
    %p60 = por %p58, %p59
    %p61 = scmp.ne.s32.totalorder %s47, %s48
    %p62 = scmp.eq.s32.totalorder %s14, 2
    %p63 = por %p61, %p62
    %p65 = scmp.ne.s32.totalorder %s48, %s64
    %p66 = scmp.eq.s32.totalorder %s14, 0
    %p67 = por %p65, %p66
    %s68 = ssub.s32 %s8, %s15
    %p69 = scmp.eq.s32.totalorder %s68, 0
    %s71 = sadd.s32 %s70, 1
    %s72 = scalar_select %p69, %s70, %s71
    %p75 = pneg %p69
    %p76 = scmp.eq.s32.totalorder %s8, 2
    %p77 = por %p75, %p76
    %p78 = scmp.ne.s32.totalorder %s70, %s73
    %p79 = scmp.eq.s32.totalorder %s8, 0
    %p80 = por %p78, %p79
    %p81 = scmp.ne.s32.totalorder %s70, %s73
    %p82 = scmp.eq.s32.totalorder %s13, 2
    %p83 = por %p81, %p82
    %p84 = scmp.ne.s32.totalorder %s73, %s74
    %p85 = scmp.eq.s32.totalorder %s13, 0
    %p86 = por %p84, %p85
    %p87 = scmp.ne.s32.totalorder %s73, %s74
    %p88 = scmp.eq.s32.totalorder %s14, 2
    %p89 = por %p87, %p88
    %p91 = scmp.ne.s32.totalorder %s74, %s90
    %p92 = scmp.eq.s32.totalorder %s14, 0
    %p93 = por %p91, %p92
    %p94 = scmp.le.s32.totalorder 1, %s8
    %p95 = scmp.lt.s32.totalorder %s8, 4
    %p96 = pnand %p94, %p95
    %p97 = pneg %p96
    // Predicated region
    $region9: #{complex_to_real_batch.1} parent=5 // pred_check
      _
    $region10: #{complex_to_real_batch.1} parent=5 // pred_check_branch
      %99 = sbr.rel (%p96) target = $region12
    $region11: #{complex_to_real_batch.1} parent=5 // pred_region
      %s100 = ssub.s32 %s8, 1
    $region12: #{complex_to_real_batch.1} parent=5 // pred_fallthru
      _
    %p101 = scmp.lt.s32.totalorder %s8, 3
    // Predicated region
    $region13: #{complex_to_real_batch.1} parent=5 // pred_check
      %p102 = pneg %p101
    $region14: #{complex_to_real_batch.1} parent=5 // pred_check_branch
      %104 = sbr.rel (%p102) target = $region16
    $region15: #{complex_to_real_batch.1} parent=5 // pred_region
      // Predicated region
      $region17: #{complex_to_real_batch.1} parent=15 // pred_check
        %p105 = pneg %p28
      $region18: #{complex_to_real_batch.1} parent=15 // pred_check_branch
        %107 = sbr.rel (%p105) target = $region20
      $region19: #{complex_to_real_batch.1} parent=15 // pred_region
        %p108 = scmp.lt.s32.totalorder %s8, 2
        %s109 = scalar_select %p108, %s8, 2
        %s110 = smul.addr %s109, 2
        %s111 = smul.addr %s110, 8
        %s112 = scalar_lea.vmem %s0, %s111
      $region20: #{complex_to_real_batch.1} parent=15 // pred_fallthru
        _
      // Predicated region
      $region21: #{complex_to_real_batch.1} parent=15 // pred_check
        %p113 = pneg %p54
      $region22: #{complex_to_real_batch.1} parent=15 // pred_check_branch
        %115 = sbr.rel (%p113) target = $region24
      $region23: #{complex_to_real_batch.1} parent=15 // pred_region
        %p116 = scmp.lt.s32.totalorder %s8, 2
        %s117 = scalar_select %p116, %s8, 2
        %s118 = smul.addr %s117, 2
        %s119 = smul.addr %s118, 8
        %s120 = scalar_lea.vmem %s1, %s119
      $region24: #{complex_to_real_batch.1} parent=15 // pred_fallthru
        _
    $region16: #{complex_to_real_batch.1} parent=5 // pred_fallthru
      _
    %p121 = scmp.le.s32.totalorder 1, %s8
    %p122 = scmp.lt.s32.totalorder %s8, 4
    %p123 = pnand %p121, %p122
    %p124 = pneg %p123
    // Predicated region
    $region25: #{complex_to_real_batch.1} parent=5 // pred_check
      _
    $region26: #{complex_to_real_batch.1} parent=5 // pred_check_branch
      %126 = sbr.rel (%p123) target = $region28
    $region27: #{complex_to_real_batch.1} parent=5 // pred_region
      %s127 = ssub.s32 %s8, 1
      %p128 = scmp.lt.s32.totalorder %s13, 2
      %s129 = scalar_select %p128, %s13, 2
      %s130 = smul.addr %s129, 2
      %s131 = smul.addr %s130, 8
      %s132 = scalar_lea.vmem %s0, %s131
      %p133 = pneg %p34
      %p134 = pneg %p31
      %p135 = scmp.lt.s32.totalorder %s13, 2
      %s136 = scalar_select %p135, %s13, 2
      %s137 = smul.addr %s136, 2
      %s138 = smul.addr %s137, 8
      %s139 = scalar_lea.vmem %s1, %s138
      %p140 = pneg %p60
      %p141 = pneg %p57
      %p142 = pneg %p86
      %p143 = pneg %p83
      %p144 = scmp.lt.s32.totalorder %s13, 2
      %s145 = scalar_select %p144, %s13, 2
      %s146 = smul.addr %s145, 4
      %s147 = smul.addr %s146, 8
      %s148 = scalar_lea.vmem %s2, %s147
      %p149 = scmp.lt.s32.totalorder %s13, 2
      %s150 = scalar_select %p149, %s13, 2
      %s151 = smul.addr %s150, 2
      %s152 = smul.addr %s151, 8
      %s153 = scalar_lea.vmem %s0, %s152
      %p154 = scmp.lt.s32.totalorder %s13, 2
      %s155 = scalar_select %p154, %s13, 2
      %s156 = smul.addr %s155, 2
      %s157 = smul.addr %s156, 8
      %s158 = scalar_lea.vmem %s1, %s157
      %p159 = scmp.lt.s32.totalorder %s13, 2
      %s160 = scalar_select %p159, %s13, 2
      %s161 = smul.addr %s160, 4
      %s162 = smul.addr %s161, 8
      %s163 = scalar_lea.vmem %s2, %s162
      %v164 = vld [vmem:[%s153] sm:$0xff]
      %v165 = vld [vmem:[%s153 + $0x8] sm:$0xff]
      %166 = vst [vmem:[%s163] sm:$0xff] %v164
      %167 = vst [vmem:[%s163 + $0x8] sm:$0xff] %v165
      %v168 = vld [vmem:[%s158] sm:$0xff]
      %v169 = vld [vmem:[%s158 + $0x8] sm:$0xff]
      %170 = vst [vmem:[%s163 + $0x10] sm:$0xff] %v168
      %171 = vst [vmem:[%s163 + $0x18] sm:$0xff] %v169
      %p172 = scmp.lt.s32.totalorder %s13, 2
      %s173 = scalar_select %p172, %s13, 2
      %s174 = smul.addr %s173, 4
      %s175 = smul.addr %s174, 8
      %s176 = scalar_lea.vmem %s2, %s175
      // Predicated region
      $region29: #{complex_to_real_batch.1} parent=27 // pred_check
        %p177 = pneg %p83
      $region30: #{complex_to_real_batch.1} parent=27 // pred_check_branch
        %179 = sbr.rel (%p177) target = $region32
      $region31: #{complex_to_real_batch.1} parent=27 // pred_region
        _
      $region32: #{complex_to_real_batch.1} parent=27 // pred_fallthru
        _
    $region28: #{complex_to_real_batch.1} parent=5 // pred_fallthru
      _
    %p180 = scmp.le.s32.totalorder 2, %s8
    // Predicated region
    $region33: #{complex_to_real_batch.1} parent=5 // pred_check
      %p181 = pneg %p180
    $region34: #{complex_to_real_batch.1} parent=5 // pred_check_branch
      %183 = sbr.rel (%p181) target = $region36
    $region35: #{complex_to_real_batch.1} parent=5 // pred_region
      %s184 = ssub.s32 %s8, 2
      // Predicated region
      $region37: #{complex_to_real_batch.1} parent=35 // pred_check
        %p185 = pneg %p89
      $region38: #{complex_to_real_batch.1} parent=35 // pred_check_branch
        %187 = sbr.rel (%p185) target = $region40
      $region39: #{complex_to_real_batch.1} parent=35 // pred_region
        %p188 = scmp.lt.s32.totalorder %s14, 2
        %s189 = scalar_select %p188, %s14, 2
        %s190 = smul.addr %s189, 4
        %s191 = smul.addr %s190, 8
        %s192 = scalar_lea.vmem %s2, %s191
      $region40: #{complex_to_real_batch.1} parent=35 // pred_fallthru
        _
    $region36: #{complex_to_real_batch.1} parent=5 // pred_fallthru
      _
  $region6: #{complex_to_real_batch.1} parent=0 // loop_footer
    %s12 = sadd.s32 1, %s8
  $region7: #{complex_to_real_batch.1} parent=0 // loop_footer_branch
    %7 = sbr.rel target = $region3
  $region8: #{complex_to_real_batch.1} parent=0 // loop_exit
    _

</llo_original>
